<compile_context>
chip_gen: v7x
topology: tpu7x:2x2x1
jax: 0.10.0
libtpu: 0.0.40
codegen_flags: <defaults>
</compile_context>

<pallas_src>
import math

import numpy as np
import jax
import jax.numpy as jnp
from jax.experimental import pallas as pl
from jax.experimental.pallas import tpu as pltpu


_LANE = 128
_VMEM_LIMIT = 32 * 1024 * 1024  # raise v5e's 16 MiB default; safe on v6e/v7x


# ----------------------------------------------------------------------------
# Kernel bodies
# ----------------------------------------------------------------------------
def _make_pool_kernel(f, pS, C, project):
    """Fused AvgPool2d(+optional linear projection), one batch element/step.

    The kernel sees the batch element pre-reshaped to (S//f, f*C), so every
    pooling tap (di, dj) of output block `pi` is a static, contiguous 2D slice:
        rows  [(pi*f + di)*pS, +pS)   lanes [dj*C, (dj+1)*C)
    The f*f taps are summed on the VPU (S*C adds total — the minimum), then a
    single (pS*pS, C) @ (C, C_out) MXU matmul does the projection.
    """
    inv = 1.0 / float(f * f)

    def _pooled_block(x_ref, pi):
        base = pi * f * pS
        acc = None
        for di in range(f):
            r0 = base + di * pS
            for dj in range(f):
                piece = x_ref[r0:r0 + pS, dj * C:(dj + 1) * C].astype(jnp.float32)
                acc = piece if acc is None else acc + piece
        return acc * inv

    if project:
        def kernel(x_ref, w_ref, out_ref, pooled_ref):
            # x_ref      : (S//f, f*C)
            # w_ref      : (C, C_out_padded)
            # out_ref    : (S_pooled, C_out_padded)
            # pooled_ref : (S_pooled, C) f32 scratch
            for pi in range(pS):
                pooled_ref[pi * pS:(pi + 1) * pS, :] = _pooled_block(x_ref, pi)
            lhs = pooled_ref[...].astype(w_ref.dtype)
            out_ref[...] = jnp.dot(
                lhs, w_ref[...], preferred_element_type=jnp.float32
            ).astype(out_ref.dtype)
        return kernel

    def kernel(x_ref, out_ref):
        # pool-only (nn.Identity linear): out_ref : (S_pooled, C)
        for pi in range(pS):
            out_ref[pi * pS:(pi + 1) * pS, :] = _pooled_block(
                x_ref, pi).astype(out_ref.dtype)
    return kernel


def _proj_kernel(x_ref, w_ref, out_ref):
    # factor == 1 specialization: plain per-batch (S, C) @ (C, C_out).
    out_ref[...] = jnp.dot(
        x_ref[...].astype(w_ref.dtype), w_ref[...],
        preferred_element_type=jnp.float32
    ).astype(out_ref.dtype)


# ----------------------------------------------------------------------------
# Wrapper
# ----------------------------------------------------------------------------
def _pad_out_lanes(w):
    """Pad weight columns so the kernel's output lane dim is a 128 multiple."""
    c_out = w.shape[1]
    pad = (-c_out) % _LANE
    if pad:
        w = jnp.pad(w, ((0, 0), (0, pad)))
    return w, c_out


def _compiler_params(semantics):
    return pltpu.CompilerParams(dimension_semantics=semantics,
                                vmem_limit_bytes=_VMEM_LIMIT)


def pooling_tokens_forward(tokens, class_token, weight, factor, *,
                           compute_dtype=None):
    """
    JAX/Pallas equivalent of PoolingTokens.forward.

    tokens        : (B, S, C)
    class_token   : (B, 1, C)
    weight        : (C, C_out), applied as y = x @ weight (i.e. the nn.Linear
                    weight already transposed), or None for nn.Identity.
    factor        : int AvgPool2d kernel size.
    compute_dtype : optional MXU input dtype (e.g. jnp.bfloat16) for the
                    HBM-bound regime; accumulation stays f32 and the output
                    keeps tokens.dtype.  None = exact (no cast).

    Returns (pooled_projected_tokens, projected_class_token, None).
    """
    B, S, C = tokens.shape
    out_dtype = tokens.dtype
    itemsize = jnp.dtype(out_dtype).itemsize

    # ------------------ factor == 1: no pooling at all ---------------------
    if factor == 1:
        if weight is None:                          # Identity: pure passthrough
            return tokens, class_token, None
        cls_out = jnp.matmul(class_token, weight)   # tiny: leave to XLA
        x = tokens if compute_dtype is None else tokens.astype(compute_dtype)
        w = weight if compute_dtype is None else weight.astype(compute_dtype)
        w_p, c_out = _pad_out_lanes(w)
        c_out_p = w_p.shape[1]
        cost = pl.CostEstimate(
            flops=int(2 * B * S * C * c_out_p),
            transcendentals=0,
            bytes_accessed=int(x.size * x.dtype.itemsize
                               + w_p.size * w_p.dtype.itemsize
                               + B * S * c_out_p * itemsize))
        out = pl.pallas_call(
            _proj_kernel,
            out_shape=jax.ShapeDtypeStruct((B, S, c_out_p), out_dtype),
            grid_spec=pltpu.PrefetchScalarGridSpec(
                num_scalar_prefetch=0,
                grid=(B,),
                in_specs=[pl.BlockSpec((None, S, C), lambda b: (b, 0, 0)),
                          pl.BlockSpec((C, c_out_p), lambda b: (0, 0))],
                out_specs=pl.BlockSpec((None, S, c_out_p), lambda b: (b, 0, 0))),
            compiler_params=_compiler_params(("parallel",)),
            cost_estimate=cost,
        )(x, w_p)
        if c_out_p != c_out:
            out = out[..., :c_out]
        return out, cls_out, None

    # ------------------ factor > 1: fused pool (+ projection) --------------
    sS = int(round(math.sqrt(S)))
    assert sS * sS == S, "sequence length must be a perfect square"
    assert sS % factor == 0, "sqrt(S) must be divisible by factor"
    f = factor
    pS = sS // f
    S_pooled = pS * pS

    # Free row-major reshape: token index s = k*f + dj maps to (k, dj*C + c),
    # so every pooling tap becomes a static rectangular slice inside the kernel.
    x = tokens if compute_dtype is None else tokens.astype(compute_dtype)
    x2 = x.reshape(B, S // f, f * C)

    if weight is None:
        # Pool-only path (nn.Identity linear); class token passes through.
        kernel = _make_pool_kernel(f, pS, C, project=False)
        cost = pl.CostEstimate(
            flops=int(B * S * C),
            transcendentals=0,
            bytes_accessed=int(x2.size * x2.dtype.itemsize
                               + B * S_pooled * C * itemsize))
        out = pl.pallas_call(
            kernel,
            out_shape=jax.ShapeDtypeStruct((B, S_pooled, C), out_dtype),
            grid_spec=pltpu.PrefetchScalarGridSpec(
                num_scalar_prefetch=0,
                grid=(B,),
                in_specs=[pl.BlockSpec((None, S // f, f * C),
                                       lambda b: (b, 0, 0))],
                out_specs=pl.BlockSpec((None, S_pooled, C),
                                       lambda b: (b, 0, 0))),
            compiler_params=_compiler_params(("parallel",)),
            cost_estimate=cost,
        )(x2)
        return out, class_token, None

    # Pool + bias-free linear, fused.  The 1-row class-token projection is
    # hoisted out of the kernel (single batched XLA matmul).
    cls_out = jnp.matmul(class_token, weight)
    w = weight if compute_dtype is None else weight.astype(compute_dtype)
    w_p, c_out = _pad_out_lanes(w)
    c_out_p = w_p.shape[1]
    kernel = _make_pool_kernel(f, pS, C, project=True)
    cost = pl.CostEstimate(
        flops=int(B * (S * C + 2 * S_pooled * C * c_out_p)),
        transcendentals=0,
        bytes_accessed=int(x2.size * x2.dtype.itemsize
                           + w_p.size * w_p.dtype.itemsize
                           + B * S_pooled * c_out_p * itemsize))
    out = pl.pallas_call(
        kernel,
        out_shape=jax.ShapeDtypeStruct((B, S_pooled, c_out_p), out_dtype),
        grid_spec=pltpu.PrefetchScalarGridSpec(
            num_scalar_prefetch=0,
            grid=(B,),
            in_specs=[pl.BlockSpec((None, S // f, f * C), lambda b: (b, 0, 0)),
                      pl.BlockSpec((C, c_out_p), lambda b: (0, 0))],
            out_specs=pl.BlockSpec((None, S_pooled, c_out_p),
                                   lambda b: (b, 0, 0)),
            scratch_shapes=[pltpu.VMEM((S_pooled, C), jnp.float32)]),
        compiler_params=_compiler_params(("parallel",)),
        cost_estimate=cost,
    )(x2, w_p)
    if c_out_p != c_out:
        out = out[..., :c_out]
    return out, cls_out, None


# ----------------------------------------------------------------------------
# Pure-JAX reference (mirrors the PyTorch forward) for verification.
# ----------------------------------------------------------------------------
def _reference_forward(tokens, class_token, weight, factor):
    B, S, C = tokens.shape
    hp = jax.lax.Precision.HIGHEST
    if factor == 1:
        if weight is None:
            return tokens, class_token, None
        return (jnp.matmul(tokens, weight, precision=hp),
                jnp.matmul(class_token, weight), None)
    sS = int(round(math.sqrt(S)))
    pS = sS // factor
    x = jnp.transpose(tokens, (0, 2, 1)).reshape(B, C, sS, sS)          # NCHW
    x = x.reshape(B, C, pS, factor, pS, factor).mean(axis=(3, 5))       # AvgPool2d
    x = x.reshape(B, C, -1).transpose(0, 2, 1)                          # (B, S', C)
    if weight is None:
        return x, class_token, None
    return (jnp.matmul(x, weight, precision=hp),
            jnp.matmul(class_token, weight), None)


if __name__ == "__main__":
    B = 2
    factor = 2
    sS = 16
    S = sS * sS                  # 256 tokens on a 16x16 grid -> 8x8 = 64 pooled
    in_dim, out_dim = 128, 256   # Linear present (in_dim != out_dim), lane-aligned

    key = jax.random.PRNGKey(0)
    k_x, k_cls, k_w = jax.random.split(key, 3)
    tokens = jax.random.normal(k_x, (B, S, in_dim), dtype=jnp.float32)
    class_token = jax.random.normal(k_cls, (B, 1, in_dim), dtype=jnp.float32)
    # nn.Linear(in_dim, out_dim, bias=False): weight is (out_dim, in_dim),
    # applied as x @ W.T -> pass the transposed (in_dim, out_dim) form.
    bound = 1.0 / math.sqrt(in_dim)
    weight = jax.random.uniform(k_w, (in_dim, out_dim), dtype=jnp.float32,
                                minval=-bound, maxval=bound)

    # --- main path: factor=2 pooling fused with the projection -------------
    out_tok, out_cls, _ = pooling_tokens_forward(tokens, class_token, weight,
                                                 factor)
    out_tok = jax.block_until_ready(out_tok)
    out_cls = jax.block_until_ready(out_cls)
    ref_tok, ref_cls, _ = _reference_forward(tokens, class_token, weight, factor)
    assert out_tok.shape == (B, S // (factor * factor), out_dim)
    assert out_cls.shape == (B, 1, out_dim)
    np.testing.assert_allclose(np.asarray(out_tok), np.asarray(ref_tok),
                               rtol=1e-5, atol=1e-5)
    np.testing.assert_allclose(np.asarray(out_cls), np.asarray(ref_cls),
                               rtol=1e-5, atol=1e-5)

    # --- specialized path: factor=1 (projection-only kernel) ---------------
    out_tok1, out_cls1, _ = pooling_tokens_forward(tokens, class_token, weight, 1)
    out_tok1 = jax.block_until_ready(out_tok1)
    ref_tok1, ref_cls1, _ = _reference_forward(tokens, class_token, weight, 1)
    np.testing.assert_allclose(np.asarray(out_tok1), np.asarray(ref_tok1),
                               rtol=1e-5, atol=1e-5)
    np.testing.assert_allclose(np.asarray(out_cls1), np.asarray(ref_cls1),
                               rtol=1e-5, atol=1e-5)

    # --- specialized path: factor=2 with Identity linear (pool-only) -------
    out_tok2, out_cls2, _ = pooling_tokens_forward(tokens, class_token, None,
                                                   factor)
    out_tok2 = jax.block_until_ready(out_tok2)
    ref_tok2, _, _ = _reference_forward(tokens, class_token, None, factor)
    np.testing.assert_allclose(np.asarray(out_tok2), np.asarray(ref_tok2),
                               rtol=1e-5, atol=1e-5)
    assert out_cls2.shape == class_token.shape

    print("KERNEL_OK")
</pallas_src>

<mosaic_0001>
module attributes {stable_mosaic.version = 11 : i64} {
  func.func @kernel(%arg0: i32, %arg1: memref<1x128x256xf32, #tpu.memory_space<vmem>>, %arg2: memref<128x256xf32, #tpu.memory_space<vmem>>, %arg3: memref<1x64x256xf32, #tpu.memory_space<vmem>>, %arg4: memref<64x128xf32, #tpu.memory_space<vmem>>) attributes {dimension_semantics = [#tpu.dimension_semantics<parallel>], iteration_bounds = array<i64: 2>, scalar_prefetch = 0 : i64, scratch_operands = 1 : i64, tpu.core_type = #tpu.core_type<tc>, window_params = [{transform_indices = @transform_0, window_bounds = array<i64: 1, 128, 256>}, {pipeline_mode = #tpu.pipeline_mode<synchronous>, transform_indices = @transform_1, window_bounds = array<i64: 128, 256>}, {transform_indices = @transform_2, window_bounds = array<i64: 1, 64, 256>}]} {
    %c0 = arith.constant 0 : index
    %c0_0 = arith.constant 0 : index
    %c0_1 = arith.constant 0 : index
    %0 = vector.load %arg1[%c0, %c0_0, %c0_1] : memref<1x128x256xf32, #tpu.memory_space<vmem>>, vector<1x8x128xf32>
    %1 = vector.shape_cast %0 : vector<1x8x128xf32> to vector<8x128xf32>
    %c0_2 = arith.constant 0 : index
    %c0_3 = arith.constant 0 : index
    %c128 = arith.constant 128 : index
    %2 = vector.load %arg1[%c0_2, %c0_3, %c128] : memref<1x128x256xf32, #tpu.memory_space<vmem>>, vector<1x8x128xf32>
    %3 = vector.shape_cast %2 : vector<1x8x128xf32> to vector<8x128xf32>
    %4 = arith.addf %1, %3 : vector<8x128xf32>
    %c0_4 = arith.constant 0 : index
    %c8 = arith.constant 8 : index
    %c0_5 = arith.constant 0 : index
    %5 = vector.load %arg1[%c0_4, %c8, %c0_5] : memref<1x128x256xf32, #tpu.memory_space<vmem>>, vector<1x8x128xf32>
    %6 = vector.shape_cast %5 : vector<1x8x128xf32> to vector<8x128xf32>
    %7 = arith.addf %4, %6 : vector<8x128xf32>
    %c0_6 = arith.constant 0 : index
    %c8_7 = arith.constant 8 : index
    %c128_8 = arith.constant 128 : index
    %8 = vector.load %arg1[%c0_6, %c8_7, %c128_8] : memref<1x128x256xf32, #tpu.memory_space<vmem>>, vector<1x8x128xf32>
    %9 = vector.shape_cast %8 : vector<1x8x128xf32> to vector<8x128xf32>
    %10 = arith.addf %7, %9 : vector<8x128xf32>
    %cst = arith.constant 2.500000e-01 : f32
    %11 = vector.broadcast %cst : f32 to vector<8x128xf32>
    %12 = arith.mulf %10, %11 : vector<8x128xf32>
    %c0_9 = arith.constant 0 : index
    %c0_10 = arith.constant 0 : index
    %13 = vector.load %arg4[%c0_9, %c0_10] : memref<64x128xf32, #tpu.memory_space<vmem>>, vector<8x128xf32>
    tpu.vector_store %arg4[%c0_9, %c0_10], %12 {strides = array<i32>} : memref<64x128xf32, #tpu.memory_space<vmem>>, vector<8x128xf32>,
    %c0_11 = arith.constant 0 : index
    %c16 = arith.constant 16 : index
    %c0_12 = arith.constant 0 : index
    %14 = vector.load %arg1[%c0_11, %c16, %c0_12] : memref<1x128x256xf32, #tpu.memory_space<vmem>>, vector<1x8x128xf32>
    %15 = vector.shape_cast %14 : vector<1x8x128xf32> to vector<8x128xf32>
    %c0_13 = arith.constant 0 : index
    %c16_14 = arith.constant 16 : index
    %c128_15 = arith.constant 128 : index
    %16 = vector.load %arg1[%c0_13, %c16_14, %c128_15] : memref<1x128x256xf32, #tpu.memory_space<vmem>>, vector<1x8x128xf32>
    %17 = vector.shape_cast %16 : vector<1x8x128xf32> to vector<8x128xf32>
    %18 = arith.addf %15, %17 : vector<8x128xf32>
    %c0_16 = arith.constant 0 : index
    %c24 = arith.constant 24 : index
    %c0_17 = arith.constant 0 : index
    %19 = vector.load %arg1[%c0_16, %c24, %c0_17] : memref<1x128x256xf32, #tpu.memory_space<vmem>>, vector<1x8x128xf32>
    %20 = vector.shape_cast %19 : vector<1x8x128xf32> to vector<8x128xf32>
    %21 = arith.addf %18, %20 : vector<8x128xf32>
    %c0_18 = arith.constant 0 : index
    %c24_19 = arith.constant 24 : index
    %c128_20 = arith.constant 128 : index
    %22 = vector.load %arg1[%c0_18, %c24_19, %c128_20] : memref<1x128x256xf32, #tpu.memory_space<vmem>>, vector<1x8x128xf32>
    %23 = vector.shape_cast %22 : vector<1x8x128xf32> to vector<8x128xf32>
    %24 = arith.addf %21, %23 : vector<8x128xf32>
    %cst_21 = arith.constant 2.500000e-01 : f32
    %25 = vector.broadcast %cst_21 : f32 to vector<8x128xf32>
    %26 = arith.mulf %24, %25 : vector<8x128xf32>
    %c8_22 = arith.constant 8 : index
    %c0_23 = arith.constant 0 : index
    %27 = vector.load %arg4[%c8_22, %c0_23] : memref<64x128xf32, #tpu.memory_space<vmem>>, vector<8x128xf32>
    tpu.vector_store %arg4[%c8_22, %c0_23], %26 {strides = array<i32>} : memref<64x128xf32, #tpu.memory_space<vmem>>, vector<8x128xf32>,
    %c0_24 = arith.constant 0 : index
    %c32 = arith.constant 32 : index
    %c0_25 = arith.constant 0 : index
    %28 = vector.load %arg1[%c0_24, %c32, %c0_25] : memref<1x128x256xf32, #tpu.memory_space<vmem>>, vector<1x8x128xf32>
    %29 = vector.shape_cast %28 : vector<1x8x128xf32> to vector<8x128xf32>
    %c0_26 = arith.constant 0 : index
    %c32_27 = arith.constant 32 : index
    %c128_28 = arith.constant 128 : index
    %30 = vector.load %arg1[%c0_26, %c32_27, %c128_28] : memref<1x128x256xf32, #tpu.memory_space<vmem>>, vector<1x8x128xf32>
    %31 = vector.shape_cast %30 : vector<1x8x128xf32> to vector<8x128xf32>
    %32 = arith.addf %29, %31 : vector<8x128xf32>
    %c0_29 = arith.constant 0 : index
    %c40 = arith.constant 40 : index
    %c0_30 = arith.constant 0 : index
    %33 = vector.load %arg1[%c0_29, %c40, %c0_30] : memref<1x128x256xf32, #tpu.memory_space<vmem>>, vector<1x8x128xf32>
    %34 = vector.shape_cast %33 : vector<1x8x128xf32> to vector<8x128xf32>
    %35 = arith.addf %32, %34 : vector<8x128xf32>
    %c0_31 = arith.constant 0 : index
    %c40_32 = arith.constant 40 : index
    %c128_33 = arith.constant 128 : index
    %36 = vector.load %arg1[%c0_31, %c40_32, %c128_33] : memref<1x128x256xf32, #tpu.memory_space<vmem>>, vector<1x8x128xf32>
    %37 = vector.shape_cast %36 : vector<1x8x128xf32> to vector<8x128xf32>
    %38 = arith.addf %35, %37 : vector<8x128xf32>
    %cst_34 = arith.constant 2.500000e-01 : f32
    %39 = vector.broadcast %cst_34 : f32 to vector<8x128xf32>
    %40 = arith.mulf %38, %39 : vector<8x128xf32>
    %c16_35 = arith.constant 16 : index
    %c0_36 = arith.constant 0 : index
    %41 = vector.load %arg4[%c16_35, %c0_36] : memref<64x128xf32, #tpu.memory_space<vmem>>, vector<8x128xf32>
    tpu.vector_store %arg4[%c16_35, %c0_36], %40 {strides = array<i32>} : memref<64x128xf32, #tpu.memory_space<vmem>>, vector<8x128xf32>,
    %c0_37 = arith.constant 0 : index
    %c48 = arith.constant 48 : index
    %c0_38 = arith.constant 0 : index
    %42 = vector.load %arg1[%c0_37, %c48, %c0_38] : memref<1x128x256xf32, #tpu.memory_space<vmem>>, vector<1x8x128xf32>
    %43 = vector.shape_cast %42 : vector<1x8x128xf32> to vector<8x128xf32>
    %c0_39 = arith.constant 0 : index
    %c48_40 = arith.constant 48 : index
    %c128_41 = arith.constant 128 : index
    %44 = vector.load %arg1[%c0_39, %c48_40, %c128_41] : memref<1x128x256xf32, #tpu.memory_space<vmem>>, vector<1x8x128xf32>
    %45 = vector.shape_cast %44 : vector<1x8x128xf32> to vector<8x128xf32>
    %46 = arith.addf %43, %45 : vector<8x128xf32>
    %c0_42 = arith.constant 0 : index
    %c56 = arith.constant 56 : index
    %c0_43 = arith.constant 0 : index
    %47 = vector.load %arg1[%c0_42, %c56, %c0_43] : memref<1x128x256xf32, #tpu.memory_space<vmem>>, vector<1x8x128xf32>
    %48 = vector.shape_cast %47 : vector<1x8x128xf32> to vector<8x128xf32>
    %49 = arith.addf %46, %48 : vector<8x128xf32>
    %c0_44 = arith.constant 0 : index
    %c56_45 = arith.constant 56 : index
    %c128_46 = arith.constant 128 : index
    %50 = vector.load %arg1[%c0_44, %c56_45, %c128_46] : memref<1x128x256xf32, #tpu.memory_space<vmem>>, vector<1x8x128xf32>
    %51 = vector.shape_cast %50 : vector<1x8x128xf32> to vector<8x128xf32>
    %52 = arith.addf %49, %51 : vector<8x128xf32>
    %cst_47 = arith.constant 2.500000e-01 : f32
    %53 = vector.broadcast %cst_47 : f32 to vector<8x128xf32>
    %54 = arith.mulf %52, %53 : vector<8x128xf32>
    %c24_48 = arith.constant 24 : index
    %c0_49 = arith.constant 0 : index
    %55 = vector.load %arg4[%c24_48, %c0_49] : memref<64x128xf32, #tpu.memory_space<vmem>>, vector<8x128xf32>
    tpu.vector_store %arg4[%c24_48, %c0_49], %54 {strides = array<i32>} : memref<64x128xf32, #tpu.memory_space<vmem>>, vector<8x128xf32>,
    %c0_50 = arith.constant 0 : index
    %c64 = arith.constant 64 : index
    %c0_51 = arith.constant 0 : index
    %56 = vector.load %arg1[%c0_50, %c64, %c0_51] : memref<1x128x256xf32, #tpu.memory_space<vmem>>, vector<1x8x128xf32>
    %57 = vector.shape_cast %56 : vector<1x8x128xf32> to vector<8x128xf32>
    %c0_52 = arith.constant 0 : index
    %c64_53 = arith.constant 64 : index
    %c128_54 = arith.constant 128 : index
    %58 = vector.load %arg1[%c0_52, %c64_53, %c128_54] : memref<1x128x256xf32, #tpu.memory_space<vmem>>, vector<1x8x128xf32>
    %59 = vector.shape_cast %58 : vector<1x8x128xf32> to vector<8x128xf32>
    %60 = arith.addf %57, %59 : vector<8x128xf32>
    %c0_55 = arith.constant 0 : index
    %c72 = arith.constant 72 : index
    %c0_56 = arith.constant 0 : index
    %61 = vector.load %arg1[%c0_55, %c72, %c0_56] : memref<1x128x256xf32, #tpu.memory_space<vmem>>, vector<1x8x128xf32>
    %62 = vector.shape_cast %61 : vector<1x8x128xf32> to vector<8x128xf32>
    %63 = arith.addf %60, %62 : vector<8x128xf32>
    %c0_57 = arith.constant 0 : index
    %c72_58 = arith.constant 72 : index
    %c128_59 = arith.constant 128 : index
    %64 = vector.load %arg1[%c0_57, %c72_58, %c128_59] : memref<1x128x256xf32, #tpu.memory_space<vmem>>, vector<1x8x128xf32>
    %65 = vector.shape_cast %64 : vector<1x8x128xf32> to vector<8x128xf32>
    %66 = arith.addf %63, %65 : vector<8x128xf32>
    %cst_60 = arith.constant 2.500000e-01 : f32
    %67 = vector.broadcast %cst_60 : f32 to vector<8x128xf32>
    %68 = arith.mulf %66, %67 : vector<8x128xf32>
    %c32_61 = arith.constant 32 : index
    %c0_62 = arith.constant 0 : index
    %69 = vector.load %arg4[%c32_61, %c0_62] : memref<64x128xf32, #tpu.memory_space<vmem>>, vector<8x128xf32>
    tpu.vector_store %arg4[%c32_61, %c0_62], %68 {strides = array<i32>} : memref<64x128xf32, #tpu.memory_space<vmem>>, vector<8x128xf32>,
    %c0_63 = arith.constant 0 : index
    %c80 = arith.constant 80 : index
    %c0_64 = arith.constant 0 : index
    %70 = vector.load %arg1[%c0_63, %c80, %c0_64] : memref<1x128x256xf32, #tpu.memory_space<vmem>>, vector<1x8x128xf32>
    %71 = vector.shape_cast %70 : vector<1x8x128xf32> to vector<8x128xf32>
    %c0_65 = arith.constant 0 : index
    %c80_66 = arith.constant 80 : index
    %c128_67 = arith.constant 128 : index
    %72 = vector.load %arg1[%c0_65, %c80_66, %c128_67] : memref<1x128x256xf32, #tpu.memory_space<vmem>>, vector<1x8x128xf32>
    %73 = vector.shape_cast %72 : vector<1x8x128xf32> to vector<8x128xf32>
    %74 = arith.addf %71, %73 : vector<8x128xf32>
    %c0_68 = arith.constant 0 : index
    %c88 = arith.constant 88 : index
    %c0_69 = arith.constant 0 : index
    %75 = vector.load %arg1[%c0_68, %c88, %c0_69] : memref<1x128x256xf32, #tpu.memory_space<vmem>>, vector<1x8x128xf32>
    %76 = vector.shape_cast %75 : vector<1x8x128xf32> to vector<8x128xf32>
    %77 = arith.addf %74, %76 : vector<8x128xf32>
    %c0_70 = arith.constant 0 : index
    %c88_71 = arith.constant 88 : index
    %c128_72 = arith.constant 128 : index
    %78 = vector.load %arg1[%c0_70, %c88_71, %c128_72] : memref<1x128x256xf32, #tpu.memory_space<vmem>>, vector<1x8x128xf32>
    %79 = vector.shape_cast %78 : vector<1x8x128xf32> to vector<8x128xf32>
    %80 = arith.addf %77, %79 : vector<8x128xf32>
    %cst_73 = arith.constant 2.500000e-01 : f32
    %81 = vector.broadcast %cst_73 : f32 to vector<8x128xf32>
    %82 = arith.mulf %80, %81 : vector<8x128xf32>
    %c40_74 = arith.constant 40 : index
    %c0_75 = arith.constant 0 : index
    %83 = vector.load %arg4[%c40_74, %c0_75] : memref<64x128xf32, #tpu.memory_space<vmem>>, vector<8x128xf32>
    tpu.vector_store %arg4[%c40_74, %c0_75], %82 {strides = array<i32>} : memref<64x128xf32, #tpu.memory_space<vmem>>, vector<8x128xf32>,
    %c0_76 = arith.constant 0 : index
    %c96 = arith.constant 96 : index
    %c0_77 = arith.constant 0 : index
    %84 = vector.load %arg1[%c0_76, %c96, %c0_77] : memref<1x128x256xf32, #tpu.memory_space<vmem>>, vector<1x8x128xf32>
    %85 = vector.shape_cast %84 : vector<1x8x128xf32> to vector<8x128xf32>
    %c0_78 = arith.constant 0 : index
    %c96_79 = arith.constant 96 : index
    %c128_80 = arith.constant 128 : index
    %86 = vector.load %arg1[%c0_78, %c96_79, %c128_80] : memref<1x128x256xf32, #tpu.memory_space<vmem>>, vector<1x8x128xf32>
    %87 = vector.shape_cast %86 : vector<1x8x128xf32> to vector<8x128xf32>
    %88 = arith.addf %85, %87 : vector<8x128xf32>
    %c0_81 = arith.constant 0 : index
    %c104 = arith.constant 104 : index
    %c0_82 = arith.constant 0 : index
    %89 = vector.load %arg1[%c0_81, %c104, %c0_82] : memref<1x128x256xf32, #tpu.memory_space<vmem>>, vector<1x8x128xf32>
    %90 = vector.shape_cast %89 : vector<1x8x128xf32> to vector<8x128xf32>
    %91 = arith.addf %88, %90 : vector<8x128xf32>
    %c0_83 = arith.constant 0 : index
    %c104_84 = arith.constant 104 : index
    %c128_85 = arith.constant 128 : index
    %92 = vector.load %arg1[%c0_83, %c104_84, %c128_85] : memref<1x128x256xf32, #tpu.memory_space<vmem>>, vector<1x8x128xf32>
    %93 = vector.shape_cast %92 : vector<1x8x128xf32> to vector<8x128xf32>
    %94 = arith.addf %91, %93 : vector<8x128xf32>
    %cst_86 = arith.constant 2.500000e-01 : f32
    %95 = vector.broadcast %cst_86 : f32 to vector<8x128xf32>
    %96 = arith.mulf %94, %95 : vector<8x128xf32>
    %c48_87 = arith.constant 48 : index
    %c0_88 = arith.constant 0 : index
    %97 = vector.load %arg4[%c48_87, %c0_88] : memref<64x128xf32, #tpu.memory_space<vmem>>, vector<8x128xf32>
    tpu.vector_store %arg4[%c48_87, %c0_88], %96 {strides = array<i32>} : memref<64x128xf32, #tpu.memory_space<vmem>>, vector<8x128xf32>,
    %c0_89 = arith.constant 0 : index
    %c112 = arith.constant 112 : index
    %c0_90 = arith.constant 0 : index
    %98 = vector.load %arg1[%c0_89, %c112, %c0_90] : memref<1x128x256xf32, #tpu.memory_space<vmem>>, vector<1x8x128xf32>
    %99 = vector.shape_cast %98 : vector<1x8x128xf32> to vector<8x128xf32>
    %c0_91 = arith.constant 0 : index
    %c112_92 = arith.constant 112 : index
    %c128_93 = arith.constant 128 : index
    %100 = vector.load %arg1[%c0_91, %c112_92, %c128_93] : memref<1x128x256xf32, #tpu.memory_space<vmem>>, vector<1x8x128xf32>
    %101 = vector.shape_cast %100 : vector<1x8x128xf32> to vector<8x128xf32>
    %102 = arith.addf %99, %101 : vector<8x128xf32>
    %c0_94 = arith.constant 0 : index
    %c120 = arith.constant 120 : index
    %c0_95 = arith.constant 0 : index
    %103 = vector.load %arg1[%c0_94, %c120, %c0_95] : memref<1x128x256xf32, #tpu.memory_space<vmem>>, vector<1x8x128xf32>
    %104 = vector.shape_cast %103 : vector<1x8x128xf32> to vector<8x128xf32>
    %105 = arith.addf %102, %104 : vector<8x128xf32>
    %c0_96 = arith.constant 0 : index
    %c120_97 = arith.constant 120 : index
    %c128_98 = arith.constant 128 : index
    %106 = vector.load %arg1[%c0_96, %c120_97, %c128_98] : memref<1x128x256xf32, #tpu.memory_space<vmem>>, vector<1x8x128xf32>
    %107 = vector.shape_cast %106 : vector<1x8x128xf32> to vector<8x128xf32>
    %108 = arith.addf %105, %107 : vector<8x128xf32>
    %cst_99 = arith.constant 2.500000e-01 : f32
    %109 = vector.broadcast %cst_99 : f32 to vector<8x128xf32>
    %110 = arith.mulf %108, %109 : vector<8x128xf32>
    %c56_100 = arith.constant 56 : index
    %c0_101 = arith.constant 0 : index
    %111 = vector.load %arg4[%c56_100, %c0_101] : memref<64x128xf32, #tpu.memory_space<vmem>>, vector<8x128xf32>
    tpu.vector_store %arg4[%c56_100, %c0_101], %110 {strides = array<i32>} : memref<64x128xf32, #tpu.memory_space<vmem>>, vector<8x128xf32>,
    %c0_102 = arith.constant 0 : index
    %c0_103 = arith.constant 0 : index
    %112 = vector.load %arg4[%c0_102, %c0_103] : memref<64x128xf32, #tpu.memory_space<vmem>>, vector<64x128xf32>
    %c0_104 = arith.constant 0 : index
    %c0_105 = arith.constant 0 : index
    %113 = vector.load %arg2[%c0_104, %c0_105] : memref<128x256xf32, #tpu.memory_space<vmem>>, vector<128x256xf32>
    %cst_106 = arith.constant dense<0.000000e+00> : vector<64x256xf32>
    %114 = tpu.matmul %112, %113, %cst_106 {dimension_numbers = #tpu.dot_dimension_numbers<[1], [0], [0], [1], [0, 0, 1, 1], [], []>} : vector<64x128xf32>, vector<128x256xf32>, vector<64x256xf32> -> vector<64x256xf32>
    %c0_107 = arith.constant 0 : index
    %c0_108 = arith.constant 0 : index
    %c0_109 = arith.constant 0 : index
    %115 = vector.load %arg3[%c0_107, %c0_108, %c0_109] : memref<1x64x256xf32, #tpu.memory_space<vmem>>, vector<1x64x256xf32>
    %116 = vector.shape_cast %115 : vector<1x64x256xf32> to vector<64x256xf32>
    %117 = vector.shape_cast %114 : vector<64x256xf32> to vector<1x64x256xf32>
    tpu.vector_store %arg3[%c0_107, %c0_108, %c0_109], %117 {strides = array<i32>} : memref<1x64x256xf32, #tpu.memory_space<vmem>>, vector<1x64x256xf32>,
    return
  }
  func.func @transform_0(%arg0: i32) -> (i32, i32, i32) {
    %c0_i32 = arith.constant 0 : i32
    %c0_i32_0 = arith.constant 0 : i32
    %c0_i32_1 = arith.constant 0 : i32
    return %arg0, %c0_i32, %c0_i32_0 : i32, i32, i32
  }
  func.func @transform_1(%arg0: i32) -> (i32, i32) {
    %c0_i32 = arith.constant 0 : i32
    %c0_i32_0 = arith.constant 0 : i32
    %c0_i32_1 = arith.constant 0 : i32
    return %c0_i32, %c0_i32_0 : i32, i32
  }
  func.func @transform_2(%arg0: i32) -> (i32, i32, i32) {
    %c0_i32 = arith.constant 0 : i32
    %c0_i32_0 = arith.constant 0 : i32
    %c0_i32_1 = arith.constant 0 : i32
    return %arg0, %c0_i32, %c0_i32_0 : i32, i32, i32
  }
}

</mosaic_0001>

<llo_original>
// kernel: tpu_custom_call.1
$region0: #{tpu_custom_call.1}
  #allocation0 [shape = 'u32[]', space=smem, size = 0x4, offset = 0x4, fixed_abs, tag = 'smem constant byte address 0x4 - core index']
  #allocation1 [shape = 'u32[144,128]{1,0:T(1,128)}', space=vmem, size = 0x12000, scoped, tag = 'internal scratch']
  #allocation2 [shape = 'f32[64,128]{1,0:T(8,128)}', space=vmem, size = 0x8000, scoped, tag = 'scratch operand']
  %s0 = inlined_call_operand.hbm [shape: f32[2,128,256], index: 0, kind: input, shape index: {}]
  %s1 = inlined_call_operand.hbm [shape: f32[128,256], index: 1, kind: input, shape index: {}]
  %s2 = inlined_call_operand.hbm [shape: f32[2,64,256], index: 2, kind: output, shape index: {}]
  %s3 = sld [smem:[#allocation0]]
  $region49: #{tpu_custom_call.1} parent=0
    _
  %s5 = ssub.s32 1, %s3
  %s6 = scalar_select 0, %s5, %s3
  $region1: #{tpu_custom_call.1} parent=0
    #allocation3 [shape = 'u8[262144]{0}', space=vmem, size = 0x40000, scoped, tag = 'input window, operand 0']
    #allocation4 [shape = 's32[2]{0}', space=sflag, size = 0x8, scoped, tag = 'scoped memory for tpu_custom_call.1']
    #allocation5 [shape = 's32[2]{0}', space=sflag, size = 0x8, scoped, tag = 'scoped memory for tpu_custom_call.1']
    #allocation6 [shape = 'u8[131072]{0}', space=vmem, size = 0x20000, scoped, tag = 'input window, operand 1, single buffered']
    #allocation7 [shape = 's32[1]{0}', space=sflag, size = 0x4, scoped, tag = 'scoped memory for tpu_custom_call.1']
    #allocation8 [shape = 'u8[131072]{0}', space=vmem, size = 0x20000, scoped, tag = 'output window, operand 0']
    %7 = vsyncpa [#allocation4], 0
    %s8 = scalar_lea.sflag [#allocation4], 1
    %9 = vsyncpa %s8, 0
    %10 = vsyncpa [#allocation7], 0
    %11 = vsyncpa [#allocation5], 0
    %s12 = scalar_lea.sflag [#allocation5], 1
    %13 = vsyncpa %s12, 0
    loop: start=0, step=1, limit=4
    $region2: #{tpu_custom_call.1} parent=1 // loop_pre_header
      _
    $region3: #{tpu_custom_call.1} parent=1 // loop_header
      %s15 = sphi 0, %s19
      %p16 = scmp.ge.s32.totalorder %s15, 4
      %s25 = sphi 0, %s27
      %s28 = sphi 0, %s25
      %s29 = sphi 0, %s28
      %s45 = sphi 0, %s29
      %s49 = sphi 0, %s49
      %s51 = sphi 0, %s49
      %s52 = sphi 0, %s51
      %s66 = sphi 0, %s52
      %s72 = sphi 0, %s74
      %s75 = sphi 0, %s72
      %s76 = sphi 0, %s75
      %s92 = sphi 0, %s76
    $region4: #{tpu_custom_call.1} parent=1 // loop_header_branch
      %18 = sbr.rel (%p16) target = $region8
    $region5: #{tpu_custom_call.1} parent=1 // loop_body
      %s20 = ssub.s32 %s15, 1
      %s21 = ssub.s32 %s15, 2
      %s22 = sadd.s32 %s15, 1
      %s23 = ssub.s32 %s15, %s22
      %p24 = scmp.eq.s32.totalorder %s23, 0
      %s26 = sadd.s32 %s25, 1
      %s27 = scalar_select %p24, %s25, %s26
      %p30 = pneg %p24
      %p31 = scmp.eq.s32.totalorder %s15, 1
      %p32 = por %p30, %p31
      %p33 = scmp.ne.s32.totalorder %s25, %s28
      %p34 = scmp.eq.s32.totalorder %s15, 0
      %p35 = por %p33, %p34
      %p36 = scmp.ne.s32.totalorder %s25, %s28
      %p37 = scmp.eq.s32.totalorder %s20, 1
      %p38 = por %p36, %p37
      %p39 = scmp.ne.s32.totalorder %s28, %s29
      %p40 = scmp.eq.s32.totalorder %s20, 0
      %p41 = por %p39, %p40
      %p42 = scmp.ne.s32.totalorder %s28, %s29
      %p43 = scmp.eq.s32.totalorder %s21, 1
      %p44 = por %p42, %p43
      %p46 = scmp.ne.s32.totalorder %s29, %s45
      %p47 = scmp.eq.s32.totalorder %s21, 0
      %p48 = por %p46, %p47
      %s50 = sadd.s32 %s49, 1
      %p53 = scmp.eq.s32.totalorder %s15, 1
      %p54 = scmp.ne.s32.totalorder %s49, %s51
      %p55 = scmp.eq.s32.totalorder %s15, 0
      %p56 = por %p54, %p55
      %p57 = scmp.ne.s32.totalorder %s49, %s51
      %p58 = scmp.eq.s32.totalorder %s20, 1
      %p59 = por %p57, %p58
      %p60 = scmp.ne.s32.totalorder %s51, %s52
      %p61 = scmp.eq.s32.totalorder %s20, 0
      %p62 = por %p60, %p61
      %p63 = scmp.ne.s32.totalorder %s51, %s52
      %p64 = scmp.eq.s32.totalorder %s21, 1
      %p65 = por %p63, %p64
      %p67 = scmp.ne.s32.totalorder %s52, %s66
      %p68 = scmp.eq.s32.totalorder %s21, 0
      %p69 = por %p67, %p68
      %s70 = ssub.s32 %s15, %s22
      %p71 = scmp.eq.s32.totalorder %s70, 0
      %s73 = sadd.s32 %s72, 1
      %s74 = scalar_select %p71, %s72, %s73
      %p77 = pneg %p71
      %p78 = scmp.eq.s32.totalorder %s15, 1
      %p79 = por %p77, %p78
      %p80 = scmp.ne.s32.totalorder %s72, %s75
      %p81 = scmp.eq.s32.totalorder %s15, 0
      %p82 = por %p80, %p81
      %p83 = scmp.ne.s32.totalorder %s72, %s75
      %p84 = scmp.eq.s32.totalorder %s20, 1
      %p85 = por %p83, %p84
      %p86 = scmp.ne.s32.totalorder %s75, %s76
      %p87 = scmp.eq.s32.totalorder %s20, 0
      %p88 = por %p86, %p87
      %p89 = scmp.ne.s32.totalorder %s75, %s76
      %p90 = scmp.eq.s32.totalorder %s21, 1
      %p91 = por %p89, %p90
      %p93 = scmp.ne.s32.totalorder %s76, %s92
      %p94 = scmp.eq.s32.totalorder %s21, 0
      %p95 = por %p93, %p94
      %p96 = scmp.le.s32.totalorder 1, %s15
      %p97 = scmp.lt.s32.totalorder %s15, 3
      %p98 = pnand %p96, %p97
      %p99 = pneg %p98
      // Predicated region
      $region9: #{tpu_custom_call.1} parent=5 // pred_check
        _
      $region10: #{tpu_custom_call.1} parent=5 // pred_check_branch
        %101 = sbr.rel (%p98) target = $region12
      $region11: #{tpu_custom_call.1} parent=5 // pred_region
        %s102 = ssub.s32 %s15, 1
        // Predicated region
        $region13: #{tpu_custom_call.1} parent=11 // pred_check
          %p103 = pneg %p62
        $region14: #{tpu_custom_call.1} parent=11 // pred_check_branch
          %105 = sbr.rel (%p103) target = $region16
        $region15: #{tpu_custom_call.1} parent=11 // pred_region
          %s107 = ssub.s32 4096, 4096
          %108 = vsyncadd [#allocation7], %s107
          %s109 = sshll.u32 [#allocation6], 4
          %s110 = int_to_ptr.vmem [resolvable:$true] %s109
          %115 = dma.hbm_to_vmem [thread:$0]  %s1, 4096, %s110, [#allocation7], 256, 256, 16
        $region16: #{tpu_custom_call.1} parent=11 // pred_fallthru
          _
      $region12: #{tpu_custom_call.1} parent=5 // pred_fallthru
        _
      %p116 = scmp.lt.s32.totalorder %s15, 2
      // Predicated region
      $region17: #{tpu_custom_call.1} parent=5 // pred_check
        %p117 = pneg %p116
      $region18: #{tpu_custom_call.1} parent=5 // pred_check_branch
        %119 = sbr.rel (%p117) target = $region20
      $region19: #{tpu_custom_call.1} parent=5 // pred_region
        // Predicated region
        $region21: #{tpu_custom_call.1} parent=19 // pred_check
          %p120 = pneg %p35
        $region22: #{tpu_custom_call.1} parent=19 // pred_check_branch
          %122 = sbr.rel (%p120) target = $region24
        $region23: #{tpu_custom_call.1} parent=19 // pred_region
          %s123 = sand.u32 %s25, 1
          %s124 = scalar_lea.sflag [#allocation4], %s123
          %s125 = sand.u32 %s25, 1
          %s126 = smul.addr %s125, 256
          %s127 = scalar_lea.vmem [#allocation3], %s126
          %s129 = ssub.s32 4096, 4096
          %130 = vsyncadd %s124, %s129
          %s131 = smul.addr %s15, 32
          %s132 = smul.addr %s131, 128
          %s133 = scalar_lea.hbm %s0, %s132
          %s134 = sshll.u32 %s127, 4
          %s135 = int_to_ptr.vmem [resolvable:$true] %s134
          %140 = dma.hbm_to_vmem [thread:$0]  %s133, 4096, %s135, %s124, 256, 256, 16
        $region24: #{tpu_custom_call.1} parent=19 // pred_fallthru
          _
      $region20: #{tpu_custom_call.1} parent=5 // pred_fallthru
        _
      %p141 = scmp.le.s32.totalorder 1, %s15
      %p142 = scmp.lt.s32.totalorder %s15, 3
      %p143 = pnand %p141, %p142
      %p144 = pneg %p143
      // Predicated region
      $region25: #{tpu_custom_call.1} parent=5 // pred_check
        _
      $region26: #{tpu_custom_call.1} parent=5 // pred_check_branch
        %146 = sbr.rel (%p143) target = $region28
      $region27: #{tpu_custom_call.1} parent=5 // pred_region
        %s147 = ssub.s32 %s15, 1
        %s148 = sand.u32 %s28, 1
        %s149 = scalar_lea.sflag [#allocation4], %s148
        %s150 = sand.u32 %s28, 1
        %s151 = smul.addr %s150, 256
        %s152 = scalar_lea.vmem [#allocation3], %s151
        // Predicated region
        $region29: #{tpu_custom_call.1} parent=27 // pred_check
          %p153 = pneg %p41
        $region30: #{tpu_custom_call.1} parent=27 // pred_check_branch
          %155 = sbr.rel (%p153) target = $region32
        $region31: #{tpu_custom_call.1} parent=27 // pred_region
          %156 = dma.done %s149, 4096
        $region32: #{tpu_custom_call.1} parent=27 // pred_fallthru
          _
        // Predicated region
        $region33: #{tpu_custom_call.1} parent=27 // pred_check
          %p157 = pneg %p62
        $region34: #{tpu_custom_call.1} parent=27 // pred_check_branch
          %159 = sbr.rel (%p157) target = $region36
        $region35: #{tpu_custom_call.1} parent=27 // pred_region
          %160 = dma.done [#allocation7], 4096
        $region36: #{tpu_custom_call.1} parent=27 // pred_fallthru
          _
        %s161 = sand.u32 %s28, 1
        %s162 = scalar_lea.sflag [#allocation4], %s161
        %s163 = sand.u32 %s28, 1
        %s164 = smul.addr %s163, 256
        %s165 = scalar_lea.vmem [#allocation3], %s164
        %p166 = pneg %p41
        %p167 = pneg %p38
        %p168 = pneg %p62
        %p169 = pneg %p59
        %p170 = pneg %p88
        %p171 = pneg %p85
        %s172 = sand.u32 %s75, 1
        %s173 = scalar_lea.sflag [#allocation5], %s172
        %s174 = sand.u32 %s75, 1
        %s175 = smul.addr %s174, 128
        %s176 = scalar_lea.vmem [#allocation8], %s175
        %v177 = vld [vmem:[%s152] sm:$0xff]
        %v178 = vld [vmem:[%s152 + $0x8] sm:$0xff]
        %v179 = vadd.f32 %v177, %v178
        %v180 = vld [vmem:[%s152 + $0x10] sm:$0xff]
        %v181 = vadd.f32 %v179, %v180
        %v182 = vld [vmem:[%s152 + $0x18] sm:$0xff]
        %v183 = vadd.f32 %v181, %v182
        %v184 = vmul.f32 %v183, 0.25
        %185 = vst [vmem:[#allocation2] sm:$0xff] %v184
        %v186 = vld [vmem:[%s152 + $0x20] sm:$0xff]
        %v187 = vld [vmem:[%s152 + $0x28] sm:$0xff]
        %v188 = vadd.f32 %v186, %v187
        %v189 = vld [vmem:[%s152 + $0x30] sm:$0xff]
        %v190 = vadd.f32 %v188, %v189
        %v191 = vld [vmem:[%s152 + $0x38] sm:$0xff]
        %v192 = vadd.f32 %v190, %v191
        %v193 = vmul.f32 %v192, 0.25
        %194 = vst [vmem:[#allocation2 + $0x8] sm:$0xff] %v193
        %v195 = vld [vmem:[%s152 + $0x40] sm:$0xff]
        %v196 = vld [vmem:[%s152 + $0x48] sm:$0xff]
        %v197 = vadd.f32 %v195, %v196
        %v198 = vld [vmem:[%s152 + $0x50] sm:$0xff]
        %v199 = vadd.f32 %v197, %v198
        %v200 = vld [vmem:[%s152 + $0x58] sm:$0xff]
        %v201 = vadd.f32 %v199, %v200
        %v202 = vmul.f32 %v201, 0.25
        %203 = vst [vmem:[#allocation2 + $0x10] sm:$0xff] %v202
        %v204 = vld [vmem:[%s152 + $0x60] sm:$0xff]
        %v205 = vld [vmem:[%s152 + $0x68] sm:$0xff]
        %v206 = vadd.f32 %v204, %v205
        %v207 = vld [vmem:[%s152 + $0x70] sm:$0xff]
        %v208 = vadd.f32 %v206, %v207
        %v209 = vld [vmem:[%s152 + $0x78] sm:$0xff]
        %v210 = vadd.f32 %v208, %v209
        %v211 = vmul.f32 %v210, 0.25
        %212 = vst [vmem:[#allocation2 + $0x18] sm:$0xff] %v211
        %v213 = vld [vmem:[%s152 + $0x80] sm:$0xff]
        %v214 = vld [vmem:[%s152 + $0x88] sm:$0xff]
        %v215 = vadd.f32 %v213, %v214
        %v216 = vld [vmem:[%s152 + $0x90] sm:$0xff]
        %v217 = vadd.f32 %v215, %v216
        %v218 = vld [vmem:[%s152 + $0x98] sm:$0xff]
        %v219 = vadd.f32 %v217, %v218
        %v220 = vmul.f32 %v219, 0.25
        %221 = vst [vmem:[#allocation2 + $0x20] sm:$0xff] %v220
        %v222 = vld [vmem:[%s152 + $0xa0] sm:$0xff]
        %v223 = vld [vmem:[%s152 + $0xa8] sm:$0xff]
        %v224 = vadd.f32 %v222, %v223
        %v225 = vld [vmem:[%s152 + $0xb0] sm:$0xff]
        %v226 = vadd.f32 %v224, %v225
        %v227 = vld [vmem:[%s152 + $0xb8] sm:$0xff]
        %v228 = vadd.f32 %v226, %v227
        %v229 = vmul.f32 %v228, 0.25
        %230 = vst [vmem:[#allocation2 + $0x28] sm:$0xff] %v229
        %v231 = vld [vmem:[%s152 + $0xc0] sm:$0xff]
        %v232 = vld [vmem:[%s152 + $0xc8] sm:$0xff]
        %v233 = vadd.f32 %v231, %v232
        %v234 = vld [vmem:[%s152 + $0xd0] sm:$0xff]
        %v235 = vadd.f32 %v233, %v234
        %v236 = vld [vmem:[%s152 + $0xd8] sm:$0xff]
        %v237 = vadd.f32 %v235, %v236
        %v238 = vmul.f32 %v237, 0.25
        %239 = vst [vmem:[#allocation2 + $0x30] sm:$0xff] %v238
        %v240 = vld [vmem:[%s152 + $0xe0] sm:$0xff]
        %v241 = vld [vmem:[%s152 + $0xe8] sm:$0xff]
        %v242 = vadd.f32 %v240, %v241
        %v243 = vld [vmem:[%s152 + $0xf0] sm:$0xff]
        %v244 = vadd.f32 %v242, %v243
        %v245 = vld [vmem:[%s152 + $0xf8] sm:$0xff]
        %v246 = vadd.f32 %v244, %v245
        %v247 = vmul.f32 %v246, 0.25
        %248 = vst [vmem:[#allocation2 + $0x38] sm:$0xff] %v247
        %v249 = vld [vmem:[#allocation2] sm:$0xff]
        %v250 = vld [vmem:[#allocation2 + $0x8] sm:$0xff]
        %v251 = vld [vmem:[#allocation2 + $0x10] sm:$0xff]
        %v252 = vld [vmem:[#allocation2 + $0x18] sm:$0xff]
        %v253 = vld [vmem:[#allocation2 + $0x20] sm:$0xff]
        %v254 = vld [vmem:[#allocation2 + $0x28] sm:$0xff]
        %v255 = vld [vmem:[#allocation2 + $0x30] sm:$0xff]
        %v256 = vld [vmem:[#allocation2 + $0x38] sm:$0xff]
        %v257 = vld [vmem:[#allocation6] sm:$0xff]
        %v258 = vld [vmem:[#allocation6 + $0x8] sm:$0xff]
        %v259 = vld [vmem:[#allocation6 + $0x10] sm:$0xff]
        %v260 = vld [vmem:[#allocation6 + $0x18] sm:$0xff]
        %v261 = vld [vmem:[#allocation6 + $0x20] sm:$0xff]
        %v262 = vld [vmem:[#allocation6 + $0x28] sm:$0xff]
        %v263 = vld [vmem:[#allocation6 + $0x30] sm:$0xff]
        %v264 = vld [vmem:[#allocation6 + $0x38] sm:$0xff]
        %v265 = vld [vmem:[#allocation6 + $0x40] sm:$0xff]
        %v266 = vld [vmem:[#allocation6 + $0x48] sm:$0xff]
        %v267 = vld [vmem:[#allocation6 + $0x50] sm:$0xff]
        %v268 = vld [vmem:[#allocation6 + $0x58] sm:$0xff]
        %v269 = vld [vmem:[#allocation6 + $0x60] sm:$0xff]
        %v270 = vld [vmem:[#allocation6 + $0x68] sm:$0xff]
        %v271 = vld [vmem:[#allocation6 + $0x70] sm:$0xff]
        %v272 = vld [vmem:[#allocation6 + $0x78] sm:$0xff]
        %v273 = vld [vmem:[#allocation6 + $0x80] sm:$0xff]
        %v274 = vld [vmem:[#allocation6 + $0x88] sm:$0xff]
        %v275 = vld [vmem:[#allocation6 + $0x90] sm:$0xff]
        %v276 = vld [vmem:[#allocation6 + $0x98] sm:$0xff]
        %v277 = vld [vmem:[#allocation6 + $0xa0] sm:$0xff]
        %v278 = vld [vmem:[#allocation6 + $0xa8] sm:$0xff]
        %v279 = vld [vmem:[#allocation6 + $0xb0] sm:$0xff]
        %v280 = vld [vmem:[#allocation6 + $0xb8] sm:$0xff]
        %v281 = vld [vmem:[#allocation6 + $0xc0] sm:$0xff]
        %v282 = vld [vmem:[#allocation6 + $0xc8] sm:$0xff]
        %v283 = vld [vmem:[#allocation6 + $0xd0] sm:$0xff]
        %v284 = vld [vmem:[#allocation6 + $0xd8] sm:$0xff]
        %v285 = vld [vmem:[#allocation6 + $0xe0] sm:$0xff]
        %v286 = vld [vmem:[#allocation6 + $0xe8] sm:$0xff]
        %v287 = vld [vmem:[#allocation6 + $0xf0] sm:$0xff]
        %v288 = vld [vmem:[#allocation6 + $0xf8] sm:$0xff]
        %289 = vmatprep.subr.mxu0 %v258
        %290 = vmatpush1.msra.mxu0 %v257
        %291 = vmatprep.subr.mxu0 %v260
        %292 = vmatpush1.msra.mxu0 %v259
        %293 = vmatprep.subr.mxu0 %v262
        %294 = vmatpush1.msra.mxu0 %v261
        %295 = vmatprep.subr.mxu0 %v264
        %296 = vmatpush1.msra.mxu0 %v263
        %297 = vmatprep.subr.mxu0 %v266
        %298 = vmatpush1.msra.mxu0 %v265
        %299 = vmatprep.subr.mxu0 %v268
        %300 = vmatpush1.msra.mxu0 %v267
        %301 = vmatprep.subr.mxu0 %v270
        %302 = vmatpush1.msra.mxu0 %v269
        %303 = vmatprep.subr.mxu0 %v272
        %304 = vmatpush1.msra.mxu0 %v271
        %305 = vmatprep.subr.mxu0 %v274
        %306 = vmatpush1.msra.mxu0 %v273
        %307 = vmatprep.subr.mxu0 %v276
        %308 = vmatpush1.msra.mxu0 %v275
        %309 = vmatprep.subr.mxu0 %v278
        %310 = vmatpush1.msra.mxu0 %v277
        %311 = vmatprep.subr.mxu0 %v280
        %312 = vmatpush1.msra.mxu0 %v279
        %313 = vmatprep.subr.mxu0 %v282
        %314 = vmatpush1.msra.mxu0 %v281
        %315 = vmatprep.subr.mxu0 %v284
        %316 = vmatpush1.msra.mxu0 %v283
        %317 = vmatprep.subr.mxu0 %v286
        %318 = vmatpush1.msra.mxu0 %v285
        %319 = vmatprep.subr.mxu0 %v288
        %320 = vmatpush1.msra.mxu0 %v287
        %321 = vmatprep.subr.mxu0 0.0
        %322 = vmatpush1.msra.mxu0 0.0
        %323 = vmatprep.subr.mxu0 0.0
        %324 = vmatpush1.msra.mxu0 0.0
        %325 = vmatprep.subr.mxu0 0.0
        %326 = vmatpush1.msra.mxu0 0.0
        %327 = vmatprep.subr.mxu0 0.0
        %328 = vmatpush1.msra.mxu0 0.0
        %329 = vmatprep.subr.mxu0 0.0
        %330 = vmatpush1.msra.mxu0 0.0
        %331 = vmatprep.subr.mxu0 0.0
        %332 = vmatpush1.msra.mxu0 0.0
        %333 = vmatprep.subr.mxu0 0.0
        %334 = vmatpush1.msra.mxu0 0.0
        %335 = vmatprep.subr.mxu0 0.0
        %336 = vmatpush1.msra.mxu0 0.0
        %337 = vmatprep.subr.mxu0 0.0
        %338 = vmatpush1.msra.mxu0 0.0
        %339 = vmatprep.subr.mxu0 0.0
        %340 = vmatpush1.msra.mxu0 0.0
        %341 = vmatprep.subr.mxu0 0.0
        %342 = vmatpush1.msra.mxu0 0.0
        %343 = vmatprep.subr.mxu0 0.0
        %344 = vmatpush1.msra.mxu0 0.0
        %345 = vmatprep.subr.mxu0 0.0
        %346 = vmatpush1.msra.mxu0 0.0
        %347 = vmatprep.subr.mxu0 0.0
        %348 = vmatpush1.msra.mxu0 0.0
        %349 = vmatprep.subr.mxu0 0.0
        %350 = vmatpush1.msra.mxu0 0.0
        %351 = vmatprep.subr.mxu0 0.0
        %352 = vmatpush1.msra.mxu0 0.0
        %353 = vmatprep.mubr.f32.mxu0 0.0
        %354 = vmatmul.mubr.f32.gmra.mrb[0].mxu0 %v249
        %v355 = vpop.f32.mrb[0].mxu0
        %v356 = vadd.f32 0.0, %v355
        %v357 = vpop.f32.mrb[0].mxu0
        %v358 = vadd.f32 0.0, %v357
        %359 = vmatprep.mubr.f32.mxu0 0.0
        %360 = vmatmul.mubr.f32.gmra.mrb[0].mxu0 %v250
        %v361 = vpop.f32.mrb[0].mxu0
        %v362 = vadd.f32 0.0, %v361
        %v363 = vpop.f32.mrb[0].mxu0
        %v364 = vadd.f32 0.0, %v363
        %365 = vmatprep.mubr.f32.mxu0 0.0
        %366 = vmatmul.mubr.f32.gmra.mrb[0].mxu0 %v251
        %v367 = vpop.f32.mrb[0].mxu0
        %v368 = vadd.f32 0.0, %v367
        %v369 = vpop.f32.mrb[0].mxu0
        %v370 = vadd.f32 0.0, %v369
        %371 = vmatprep.mubr.f32.mxu0 0.0
        %372 = vmatmul.mubr.f32.gmra.mrb[0].mxu0 %v252
        %v373 = vpop.f32.mrb[0].mxu0
        %v374 = vadd.f32 0.0, %v373
        %v375 = vpop.f32.mrb[0].mxu0
        %v376 = vadd.f32 0.0, %v375
        %377 = vmatprep.mubr.f32.mxu0 0.0
        %378 = vmatmul.mubr.f32.gmra.mrb[0].mxu0 %v253
        %v379 = vpop.f32.mrb[0].mxu0
        %v380 = vadd.f32 0.0, %v379
        %v381 = vpop.f32.mrb[0].mxu0
        %v382 = vadd.f32 0.0, %v381
        %383 = vmatprep.mubr.f32.mxu0 0.0
        %384 = vmatmul.mubr.f32.gmra.mrb[0].mxu0 %v254
        %v385 = vpop.f32.mrb[0].mxu0
        %v386 = vadd.f32 0.0, %v385
        %v387 = vpop.f32.mrb[0].mxu0
        %v388 = vadd.f32 0.0, %v387
        %389 = vmatprep.mubr.f32.mxu0 0.0
        %390 = vmatmul.mubr.f32.gmra.mrb[0].mxu0 %v255
        %v391 = vpop.f32.mrb[0].mxu0
        %v392 = vadd.f32 0.0, %v391
        %v393 = vpop.f32.mrb[0].mxu0
        %v394 = vadd.f32 0.0, %v393
        %395 = vmatprep.mubr.f32.mxu0 0.0
        %396 = vmatmul.mubr.f32.gmra.mrb[0].mxu0 %v256
        %v397 = vpop.f32.mrb[0].mxu0
        %v398 = vadd.f32 0.0, %v397
        %v399 = vpop.f32.mrb[0].mxu0
        %v400 = vadd.f32 0.0, %v399
        %401 = vdwg.mxu0
        %402 = vst [vmem:[%s176] sm:$0xff] %v356
        %403 = vst [vmem:[%s176 + $0x8] sm:$0xff] %v358
        %404 = vst [vmem:[%s176 + $0x10] sm:$0xff] %v362
        %405 = vst [vmem:[%s176 + $0x18] sm:$0xff] %v364
        %406 = vst [vmem:[%s176 + $0x20] sm:$0xff] %v368
        %407 = vst [vmem:[%s176 + $0x28] sm:$0xff] %v370
        %408 = vst [vmem:[%s176 + $0x30] sm:$0xff] %v374
        %409 = vst [vmem:[%s176 + $0x38] sm:$0xff] %v376
        %410 = vst [vmem:[%s176 + $0x40] sm:$0xff] %v380
        %411 = vst [vmem:[%s176 + $0x48] sm:$0xff] %v382
        %412 = vst [vmem:[%s176 + $0x50] sm:$0xff] %v386
        %413 = vst [vmem:[%s176 + $0x58] sm:$0xff] %v388
        %414 = vst [vmem:[%s176 + $0x60] sm:$0xff] %v392
        %415 = vst [vmem:[%s176 + $0x68] sm:$0xff] %v394
        %416 = vst [vmem:[%s176 + $0x70] sm:$0xff] %v398
        %417 = vst [vmem:[%s176 + $0x78] sm:$0xff] %v400
        %s418 = sand.u32 %s75, 1
        %s419 = scalar_lea.sflag [#allocation5], %s418
        %s420 = sand.u32 %s75, 1
        %s421 = smul.addr %s420, 128
        %s422 = scalar_lea.vmem [#allocation8], %s421
        // Predicated region
        $region37: #{tpu_custom_call.1} parent=27 // pred_check
          %p423 = pneg %p85
        $region38: #{tpu_custom_call.1} parent=27 // pred_check_branch
          %425 = sbr.rel (%p423) target = $region40
        $region39: #{tpu_custom_call.1} parent=27 // pred_region
          %s427 = ssub.s32 2048, 2048
          %428 = vsyncadd %s419, %s427
          %s429 = smul.addr %s20, 16
          %s430 = smul.addr %s429, 128
          %s431 = scalar_lea.hbm %s2, %s430
          %s432 = sshll.u32 %s422, 4
          %s433 = int_to_ptr.vmem [resolvable:$true] %s432
          %438 = dma.vmem_to_hbm [thread:$0]  %s433, 2048, %s431, %s419, 256, 256, 16
        $region40: #{tpu_custom_call.1} parent=27 // pred_fallthru
          _
      $region28: #{tpu_custom_call.1} parent=5 // pred_fallthru
        _
      %p439 = scmp.le.s32.totalorder 2, %s15
      // Predicated region
      $region41: #{tpu_custom_call.1} parent=5 // pred_check
        %p440 = pneg %p439
      $region42: #{tpu_custom_call.1} parent=5 // pred_check_branch
        %442 = sbr.rel (%p440) target = $region44
      $region43: #{tpu_custom_call.1} parent=5 // pred_region
        %s443 = ssub.s32 %s15, 2
        // Predicated region
        $region45: #{tpu_custom_call.1} parent=43 // pred_check
          %p444 = pneg %p91
        $region46: #{tpu_custom_call.1} parent=43 // pred_check_branch
          %446 = sbr.rel (%p444) target = $region48
        $region47: #{tpu_custom_call.1} parent=43 // pred_region
          %s447 = sand.u32 %s76, 1
          %s448 = scalar_lea.sflag [#allocation5], %s447
          %s449 = sand.u32 %s76, 1
          %s450 = smul.addr %s449, 128
          %s451 = scalar_lea.vmem [#allocation8], %s450
          %452 = dma.done %s448, 2048
        $region48: #{tpu_custom_call.1} parent=43 // pred_fallthru
          _
      $region44: #{tpu_custom_call.1} parent=5 // pred_fallthru
        _
    $region6: #{tpu_custom_call.1} parent=1 // loop_footer
      %s19 = sadd.s32 1, %s15
    $region7: #{tpu_custom_call.1} parent=1 // loop_footer_branch
      %14 = sbr.rel target = $region3
    $region8: #{tpu_custom_call.1} parent=1 // loop_exit
      _
    %453 = vsyncpa [#allocation4], 1
    %s454 = scalar_lea.sflag [#allocation4], 1
    %455 = vsyncpa %s454, 1
    %456 = vsyncpa [#allocation7], 1
    %457 = vsyncpa [#allocation5], 1
    %s458 = scalar_lea.sflag [#allocation5], 1
    %459 = vsyncpa %s458, 1

</llo_original>
